<compile_context>
chip_gen: v7x
topology: tpu7x:2x2x1
jax: 0.10.0
libtpu: 0.0.40
codegen_flags: <defaults>
</compile_context>

<pallas_src>
import jax
import jax.numpy as jnp
from jax.experimental import pallas as pl
from jax.experimental.pallas import tpu as pltpu


def _deriv_relu_kernel_f32(x_ref, o_ref):
    # Generic path (small / unaligned tiles): f32 transpose, compare, cast.
    o_ref[...] = (x_ref[...].T > 0.0).astype(jnp.float32)


def _deriv_relu_kernel_bf16(x_ref, o_ref):
    # Fast path for 128-aligned tiles: compare in input layout, transpose a
    # packed bf16 0/1 mask (half the vregs / VMEM temp of an f32 transpose),
    # then cast to f32 on the lane-dense store. Exact: values are only 0/1.
    mask = (x_ref[...] > 0.0).astype(jnp.bfloat16)   # (TM, TN)
    o_ref[...] = mask.T.astype(jnp.float32)          # (TN, TM)


def _pick_tile(dim: int, target: int) -> int:
    """Pick a tile size for one dimension.

    Full-dim block for small dims; otherwise prefer the largest multiple of
    128 <= target that divides `dim` exactly (no ragged edge block), but do
    not shrink below target // 2 -- one ragged edge is cheaper than tiny tiles.
    """
    target = max(128, (target // 128) * 128)
    if dim <= target:
        return dim
    t = target
    floor = max(128, target // 2)
    while t >= floor:
        if dim % t == 0:
            return t
        t -= 128
    return target  # ragged edge handled by block padding (writes discarded)


def deriv_relu(x, *, tile_m: int = 1024, tile_n: int = 512):
    """Pallas implementation of DerivRelU.forward for a 2-D array x."""
    assert x.ndim == 2, "DerivRelU (torch .t()) expects a 2-D input"
    M, N = x.shape
    TM = _pick_tile(M, tile_m)
    TN = _pick_tile(N, tile_n)
    grid = (pl.cdiv(N, TN), pl.cdiv(M, TM))   # grid over the (N, M) output

    # bf16-mask transpose only for large lane-aligned tiles; small/unaligned
    # tiles take the plain f32 path.
    kernel = (_deriv_relu_kernel_bf16
              if (TM % 128 == 0 and TN % 128 == 0)
              else _deriv_relu_kernel_f32)

    # VMEM budget: double-buffered f32 input + output blocks (16*TM*TN bytes)
    # plus transpose temporaries (~4-6*TM*TN) -> ~24*TM*TN, clamped to
    # [16 MiB, 48 MiB] so it always fits v7x's 64 MiB physical VMEM while
    # still letting v5e (16 MiB default scope) take the 1024x512 default.
    vmem_limit = int(min(max(24 * TM * TN, 16 * 1024 * 1024),
                         48 * 1024 * 1024))

    return pl.pallas_call(
        kernel,
        out_shape=jax.ShapeDtypeStruct((N, M), jnp.float32),
        grid=grid,
        in_specs=[pl.BlockSpec((TM, TN), lambda i, j: (j, i))],
        out_specs=pl.BlockSpec((TN, TM), lambda i, j: (i, j)),
        compiler_params=pltpu.CompilerParams(
            dimension_semantics=("parallel", "parallel"),
            vmem_limit_bytes=vmem_limit,
        ),
        cost_estimate=pl.CostEstimate(
            flops=M * N,               # one compare per element
            transcendentals=0,
            bytes_accessed=8 * M * N,  # 4 B/elem read + 4 B/elem write
        ),
    )(x)


if __name__ == "__main__":
    key = jax.random.PRNGKey(0)
    k0, k1, k2 = jax.random.split(key, 3)

    # Small 2-D input (torch .t() is 2-D only): full-dim blocks, f32 path.
    M, N = 16, 32
    x = jax.random.normal(k0, (M, N), dtype=jnp.float32)
    out = jax.block_until_ready(deriv_relu(x))
    ref = (x.T > 0.0).astype(jnp.float32)
    assert out.shape == (N, M), out.shape
    assert out.dtype == jnp.float32, out.dtype
    assert bool(jnp.array_equal(out, ref)), "mismatch vs reference (small)"

    # Multi-block tiled path with 128-aligned divisor tiles (bf16-mask path):
    # TM=640, TN=384, grid=(3, 1), no ragged edge blocks.
    M2, N2 = 640, 1152
    x2 = jax.random.normal(k1, (M2, N2), dtype=jnp.float32)
    out2 = jax.block_until_ready(deriv_relu(x2))
    ref2 = (x2.T > 0.0).astype(jnp.float32)
    assert out2.shape == (N2, M2), out2.shape
    assert bool(jnp.array_equal(out2, ref2)), "mismatch vs reference (tiled)"

    # Ragged-edge path (no 128-multiple divisor tile exists for N): TM=272
    # (full dim), TN=512 with a padded edge block on the last grid step.
    M3, N3 = 272, 1300
    x3 = jax.random.normal(k2, (M3, N3), dtype=jnp.float32)
    out3 = jax.block_until_ready(deriv_relu(x3))
    ref3 = (x3.T > 0.0).astype(jnp.float32)
    assert out3.shape == (N3, M3), out3.shape
    assert bool(jnp.array_equal(out3, ref3)), "mismatch vs reference (ragged)"

    print("KERNEL_OK")
</pallas_src>

<mosaic_0001>
module attributes {stable_mosaic.version = 11 : i64} {
  func.func @_deriv_relu_kernel_f32(%arg0: i32, %arg1: i32, %arg2: memref<16x32xf32, #tpu.memory_space<vmem>>, %arg3: memref<32x16xf32, #tpu.memory_space<vmem>>) attributes {dimension_semantics = [#tpu.dimension_semantics<parallel>, #tpu.dimension_semantics<parallel>], iteration_bounds = array<i64: 1, 1>, scalar_prefetch = 0 : i64, scratch_operands = 0 : i64, tpu.core_type = #tpu.core_type<tc>, window_params = [{transform_indices = @transform_0, window_bounds = array<i64: 16, 32>}, {transform_indices = @transform_1, window_bounds = array<i64: 32, 16>}]} {
    %c0 = arith.constant 0 : index
    %c0_0 = arith.constant 0 : index
    %0 = vector.load %arg2[%c0, %c0_0] : memref<16x32xf32, #tpu.memory_space<vmem>>, vector<16x32xf32>
    %1 = tpu.transpose %0, [1, 0] : vector<16x32xf32> -> vector<32x16xf32>
    %cst = arith.constant 0.000000e+00 : f32
    %2 = vector.broadcast %cst : f32 to vector<32x16xf32>
    %3 = arith.cmpf ogt, %1, %2 : vector<32x16xf32>
    %4 = arith.extui %3 : vector<32x16xi1> to vector<32x16xi32>
    %5 = arith.sitofp %4 : vector<32x16xi32> to vector<32x16xf32>
    %c0_1 = arith.constant 0 : index
    %c0_2 = arith.constant 0 : index
    %6 = vector.load %arg3[%c0_1, %c0_2] : memref<32x16xf32, #tpu.memory_space<vmem>>, vector<32x16xf32>
    tpu.vector_store %arg3[%c0_1, %c0_2], %5 {strides = array<i32>} : memref<32x16xf32, #tpu.memory_space<vmem>>, vector<32x16xf32>,
    return
  }
  func.func @transform_0(%arg0: i32, %arg1: i32) -> (i32, i32) {
    %c0_i32 = arith.constant 0 : i32
    return %arg1, %arg0 : i32, i32
  }
  func.func @transform_1(%arg0: i32, %arg1: i32) -> (i32, i32) {
    %c0_i32 = arith.constant 0 : i32
    return %arg0, %arg1 : i32, i32
  }
}

</mosaic_0001>

<llo_original>
// kernel: tpu_custom_call.1
$region0: #{tpu_custom_call.1}
  #allocation0 [shape = 'u32[]', space=smem, size = 0x4, offset = 0x4, fixed_abs, tag = 'smem constant byte address 0x4 - core index']
  #allocation1 [shape = 'u32[144,128]{1,0:T(1,128)}', space=vmem, size = 0x12000, scoped, tag = 'internal scratch']
  %s0 = inlined_call_operand.hbm [shape: f32[16,32], index: 0, kind: input, shape index: {}]
  %s1 = inlined_call_operand.vmem [shape: f32[32,16], index: 1, kind: output, shape index: {}]
  %s2 = sld [smem:[#allocation0]]
  $region18: #{tpu_custom_call.1} parent=0
    _
  %s4 = ssub.s32 1, %s2
  %s5 = scalar_select 0, %s4, %s2
  $region1: #{tpu_custom_call.1} parent=0
    #allocation2 [shape = 'u8[8192]{0}', space=vmem, size = 0x2000, scoped, tag = 'input window, operand 0, single buffered']
    #allocation3 [shape = 's32[1]{0}', space=sflag, size = 0x4, scoped, tag = 'scoped memory for tpu_custom_call.1']
    %6 = vsyncpa [#allocation3], 0
    // Predicated region
    $region2: #{tpu_custom_call.1} parent=1 // pred_check
      _
    $region3: #{tpu_custom_call.1} parent=1 // pred_check_branch
      %8 = sbr.rel (0) target = $region5
    $region4: #{tpu_custom_call.1} parent=1 // pred_region
      %s10 = ssub.s32 256, 256
      %11 = vsyncadd [#allocation3], %s10
      %s12 = sshll.u32 [#allocation2], 4
      %s13 = int_to_ptr.vmem [resolvable:$true] %s12
      %18 = dma.hbm_to_vmem [thread:$0]  %s0, 256, %s13, [#allocation3], 128, 128, 8
    $region5: #{tpu_custom_call.1} parent=1 // pred_fallthru
      _
    // Predicated region
    $region6: #{tpu_custom_call.1} parent=1 // pred_check
      _
    $region7: #{tpu_custom_call.1} parent=1 // pred_check_branch
      %20 = sbr.rel (0) target = $region9
    $region8: #{tpu_custom_call.1} parent=1 // pred_region
      %21 = dma.done [#allocation3], 256
    $region9: #{tpu_custom_call.1} parent=1 // pred_fallthru
      _
    %v22 = vld [vmem:[#allocation2] sm:$0xff]
    %v23 = vld [vmem:[#allocation2 + $0x8] sm:$0xff]
    %24 = vxpose.xlu0.b32.start [1/16] %v22, 128
    %25 = vxpose.xlu0.b32.cont [2/16] %v23, 128
    %26 = vxpose.xlu0.b32.cont [3/16] 0.0, 128
    %27 = vxpose.xlu0.b32.cont [4/16] 0.0, 128
    %28 = vxpose.xlu0.b32.cont [5/16] 0.0, 128
    %29 = vxpose.xlu0.b32.cont [6/16] 0.0, 128
    %30 = vxpose.xlu0.b32.cont [7/16] 0.0, 128
    %31 = vxpose.xlu0.b32.cont [8/16] 0.0, 128
    %32 = vxpose.xlu0.b32.cont [9/16] 0.0, 128
    %33 = vxpose.xlu0.b32.cont [10/16] 0.0, 128
    %34 = vxpose.xlu0.b32.cont [11/16] 0.0, 128
    %35 = vxpose.xlu0.b32.cont [12/16] 0.0, 128
    %36 = vxpose.xlu0.b32.cont [13/16] 0.0, 128
    %37 = vxpose.xlu0.b32.cont [14/16] 0.0, 128
    %38 = vxpose.xlu0.b32.cont [15/16] 0.0, 128
    %39 = vxpose.xlu0.b32.end [16/16] 0.0, 128
    %v40 = vpop.trf.xlu0
    %v41 = vpop.trf.xlu0
    %v42 = vpop.trf.xlu0
    %v43 = vpop.trf.xlu0
    %v44 = vpop.trf.xlu0
    %v45 = vpop.trf.xlu0
    %v46 = vpop.trf.xlu0
    %v47 = vpop.trf.xlu0
    %v48 = vpop.trf.xlu0
    %v49 = vpop.trf.xlu0
    %v50 = vpop.trf.xlu0
    %v51 = vpop.trf.xlu0
    %v52 = vpop.trf.xlu0
    %v53 = vpop.trf.xlu0
    %v54 = vpop.trf.xlu0
    %v55 = vpop.trf.xlu0
    %vm56 = vcmp.gt.f32.partialorder %v40, 0.0
    %vm57 = vcmp.gt.f32.partialorder %v41, 0.0
    %vm58 = vcmp.gt.f32.partialorder %v42, 0.0
    %vm59 = vcmp.gt.f32.partialorder %v43, 0.0
    %v60 = vsel %vm56, 1, 0
    %v61 = vsel %vm57, 1, 0
    %v62 = vsel %vm58, 1, 0
    %v63 = vsel %vm59, 1, 0
    %v64 = vcvt.s32.f32 %v60
    %v65 = vcvt.s32.f32 %v61
    %v66 = vcvt.s32.f32 %v62
    %v67 = vcvt.s32.f32 %v63
    %vm68 = vcmask 130048
    %69 = vst.msk [vmem:[%s1] sm:$0xff] %vm68, %v64
    %70 = vst.msk [vmem:[%s1 + $0x8] sm:$0xff] %vm68, %v65
    %71 = vst.msk [vmem:[%s1 + $0x10] sm:$0xff] %vm68, %v66
    %72 = vst.msk [vmem:[%s1 + $0x18] sm:$0xff] %vm68, %v67
    // Predicated region
    $region10: #{tpu_custom_call.1} parent=1 // pred_check
      _
    $region11: #{tpu_custom_call.1} parent=1 // pred_check_branch
      %74 = sbr.rel (0) target = $region13
    $region12: #{tpu_custom_call.1} parent=1 // pred_region
      _
    $region13: #{tpu_custom_call.1} parent=1 // pred_fallthru
      _
    // Predicated region
    $region14: #{tpu_custom_call.1} parent=1 // pred_check
      _
    $region15: #{tpu_custom_call.1} parent=1 // pred_check_branch
      %76 = sbr.rel (0) target = $region17
    $region16: #{tpu_custom_call.1} parent=1 // pred_region
      _
    $region17: #{tpu_custom_call.1} parent=1 // pred_fallthru
      _
    %77 = vsyncpa [#allocation3], 1

</llo_original>
